<compile_context>
chip_gen: v7x
topology: tpu7x:2x2x1
jax: 0.10.0
libtpu: 0.0.40
codegen_flags: <defaults>
</compile_context>

<pallas_src>
import jax
import jax.numpy as jnp
import numpy as np
from jax.experimental import pallas as pl
from jax.experimental.pallas import tpu as pltpu

EPS = 1e-5       # BatchNorm2d default eps
KH = KW = 3
STRIDE = 2
PAD = 1
OUT_PAD = 1


def _round_up(x, m):
    return ((x + m - 1) // m) * m


# ---------------------------------------------------------------------------
# Pass 1: phase matmul + per-tile per-channel BN partial sums (stats ONLY).
# ---------------------------------------------------------------------------
def _stats_kernel(p_ref, w_ref, stats_ref):
    # p_ref:     (bm, Kp)  shifted-input slab tile (compute dtype)
    # w_ref:     (Kp, bn)  block-structured phase weights (compute dtype)
    # stats_ref: (8,  bn)  row 0 = sum(y), row 1 = sum(y^2); rows 2-7 unused
    y = jnp.dot(p_ref[...], w_ref[...], preferred_element_type=jnp.float32)
    stats_ref[0:1, :] = jnp.sum(y, axis=0, keepdims=True)
    stats_ref[1:2, :] = jnp.sum(y * y, axis=0, keepdims=True)


# ---------------------------------------------------------------------------
# Pass 2: recomputed phase matmul fused with BN affine (single FMA) + ReLU.
# ---------------------------------------------------------------------------
def _conv_bn_relu_kernel(p_ref, w_ref, scale_ref, shift_ref, o_ref):
    # scale/shift: (1, bn) f32, broadcast over rows
    y = jnp.dot(p_ref[...], w_ref[...], preferred_element_type=jnp.float32)
    o = y * scale_ref[...] + shift_ref[...]
    o_ref[...] = jnp.maximum(o, 0.0).astype(o_ref.dtype)


# ---------------------------------------------------------------------------
# Phase-decomposition weight matrix.
# Column layout: col = phase*Cout + oc, phase = 2*ph + pw (output pixel (2h+ph, 2w+pw)).
# Row layout:    row = shift*Cin + ic, shift 0:(h,w) 1:(h,w+1) 2:(h+1,w) 3:(h+1,w+1).
# ---------------------------------------------------------------------------
def _build_phase_weight(weight):
    cin, cout = weight.shape[0], weight.shape[1]
    wb = jnp.zeros((4 * cin, 4 * cout), jnp.float32)
    # (input-shift block, phase block, kh, kw) of the ConvTranspose2d weight
    taps = [
        (0, 0, 1, 1),                                          # y[2h,   2w]
        (0, 1, 1, 2), (1, 1, 1, 0),                            # y[2h,   2w+1]
        (0, 2, 2, 1), (2, 2, 0, 1),                            # y[2h+1, 2w]
        (0, 3, 2, 2), (1, 3, 2, 0), (2, 3, 0, 2), (3, 3, 0, 0) # y[2h+1, 2w+1]
    ]
    for kb, p, kh, kw in taps:
        wb = wb.at[kb * cin:(kb + 1) * cin, p * cout:(p + 1) * cout].set(
            weight[:, :, kh, kw].astype(jnp.float32))
    return wb


# ---------------------------------------------------------------------------
# Wrapper
# ---------------------------------------------------------------------------
def decoder_block_forward(x_nchw, weight, gamma, beta, *,
                          block_m=1024, block_n=512,
                          compute_dtype=jnp.bfloat16):
    """x_nchw: (N, Cin, H, W); weight: (Cin, Cout, 3, 3) (ConvTranspose2d layout)."""
    N, Cin, H, W = x_nchw.shape
    Cout = weight.shape[1]
    OH, OW = STRIDE * H, STRIDE * W
    M = N * H * W
    K = 4 * Cin
    Nc = 4 * Cout

    # --- glue: 4 shifted views of x stacked along channels (no dilation zeros).
    # Cast to the MXU compute dtype FIRST so the slab intermediates are
    # half-width on the bf16 path; pad/concat/reshape is one fused expression.
    xt = jnp.transpose(x_nchw, (0, 2, 3, 1)).astype(compute_dtype)    # (N,H,W,Cin)
    xp = jnp.pad(xt, ((0, 0), (0, 1), (0, 1), (0, 0)))                # (N,H+1,W+1,Cin)
    patches = jnp.concatenate(
        [xp[:, :H, :W, :], xp[:, :H, 1:, :], xp[:, 1:, :W, :], xp[:, 1:, 1:, :]],
        axis=-1).reshape(M, K)                                        # (M, 4Cin)

    w_big = _build_phase_weight(weight)                               # (4Cin, 4Cout) f32

    # --- padding / tile sizes -------------------------------------------------
    sub = 16 if compute_dtype == jnp.bfloat16 else 8
    # Pad K only to the minimal legal multiple when it is small (full-K block is
    # legal because the block dim equals the padded array dim).
    Kp = _round_up(K, 128) if K >= 128 else _round_up(K, sub)
    Np = _round_up(Nc, 128)

    # Output-channel tiling: bn always divides Np (Np is a multiple of 128).
    bn = min(_round_up(block_n, 128), Np)
    while Np % bn:
        bn -= 128

    # Row tiling: keep Gm >= 4 so the "parallel" grid splits evenly across
    # v7x's two TensorCores even for modest M.
    bm = min(_round_up(block_m, 8), _round_up(max((M + 3) // 4, 8), 8))
    Mp = _round_up(M, bm)
    Gm = Mp // bm
    Gn = Np // bn

    patches = jnp.pad(patches, ((0, Mp - M), (0, Kp - K)))
    w_pad = jnp.pad(w_big, ((0, Kp - K), (0, Np - Nc))).astype(compute_dtype)

    itemsize = jnp.dtype(compute_dtype).itemsize
    cparams = pltpu.CompilerParams(
        dimension_semantics=("parallel", "parallel"),
        vmem_limit_bytes=64 * 1024 * 1024)

    # --- pass 1: matmul + per-tile BN partial sums (no y written to HBM) -------
    cost1 = pl.CostEstimate(
        flops=2 * Mp * Kp * Np + 3 * Mp * Np,
        transcendentals=0,
        bytes_accessed=Mp * Kp * itemsize + Gn * Kp * bn * itemsize
                       + Gm * 8 * Np * 4)
    stats = pl.pallas_call(
        _stats_kernel,
        out_shape=jax.ShapeDtypeStruct((Gm * 8, Np), jnp.float32),
        grid_spec=pltpu.PrefetchScalarGridSpec(
            num_scalar_prefetch=0, grid=(Gm, Gn),
            in_specs=[pl.BlockSpec((bm, Kp), lambda i, j: (i, 0)),
                      pl.BlockSpec((Kp, bn), lambda i, j: (0, j))],
            out_specs=pl.BlockSpec((8, bn), lambda i, j: (i, j))),
        compiler_params=cparams,
        cost_estimate=cost1,
    )(patches, w_pad)

    # --- global BN stats + folded scale/shift (tiny Cout-length vectors, XLA) --
    stats = stats.reshape(Gm, 8, Np)
    s_cols = jnp.sum(stats[:, 0, :], axis=0)[:Nc]
    ss_cols = jnp.sum(stats[:, 1, :], axis=0)[:Nc]
    s_oc = s_cols.reshape(4, Cout).sum(axis=0)          # combine the 4 phases / channel
    ss_oc = ss_cols.reshape(4, Cout).sum(axis=0)
    count = float(N * OH * OW)
    mean = s_oc / count
    var = jnp.maximum(ss_oc / count - mean * mean, 0.0)  # biased variance (PyTorch BN fwd)
    inv_std = jax.lax.rsqrt(var + EPS)
    scale_oc = gamma.astype(jnp.float32) * inv_std
    shift_oc = beta.astype(jnp.float32) - mean * scale_oc
    scale = jnp.pad(jnp.tile(scale_oc, 4), (0, Np - Nc)).reshape(1, Np)
    shift = jnp.pad(jnp.tile(shift_oc, 4), (0, Np - Nc)).reshape(1, Np)

    # --- pass 2: recomputed matmul fused with BN FMA + ReLU (lane-dense stores) -
    cost2 = pl.CostEstimate(
        flops=2 * Mp * Kp * Np + 3 * Mp * Np,
        transcendentals=0,
        bytes_accessed=Mp * Kp * itemsize + Gn * Kp * bn * itemsize
                       + Mp * Np * 4 + 2 * Np * 4)
    out_flat = pl.pallas_call(
        _conv_bn_relu_kernel,
        out_shape=jax.ShapeDtypeStruct((Mp, Np), jnp.float32),
        grid_spec=pltpu.PrefetchScalarGridSpec(
            num_scalar_prefetch=0, grid=(Gm, Gn),
            in_specs=[pl.BlockSpec((bm, Kp), lambda i, j: (i, 0)),
                      pl.BlockSpec((Kp, bn), lambda i, j: (0, j)),
                      pl.BlockSpec((1, bn), lambda i, j: (0, j)),
                      pl.BlockSpec((1, bn), lambda i, j: (0, j))],
            out_specs=pl.BlockSpec((bm, bn), lambda i, j: (i, j))),
        compiler_params=cparams,
        cost_estimate=cost2,
    )(patches, w_pad, scale, shift)

    # --- glue: phase columns -> NCHW.
    # TODO(synk): this transpose is a full extra HBM read+write; if the consumer
    # accepts the (N,H,W,2,2,Cout) phase layout, return out_flat and skip it.
    out = out_flat[:M, :Nc].reshape(N, H, W, 2, 2, Cout)       # (n,h,w,ph,pw,oc)
    out = out.transpose(0, 5, 1, 3, 2, 4).reshape(N, Cout, OH, OW)
    return out


# ---------------------------------------------------------------------------
# Pure-JAX reference (independent derivation, PyTorch semantics)
# ---------------------------------------------------------------------------
def reference_forward(x_nchw, weight, gamma, beta):
    Cout = weight.shape[1]
    w_conv = jnp.flip(weight, axis=(2, 3)).transpose(1, 0, 2, 3)   # (Cout, Cin, KH, KW)
    y = jax.lax.conv_general_dilated(
        x_nchw, w_conv,
        window_strides=(1, 1),
        padding=((KH - 1 - PAD, KH - 1 - PAD + OUT_PAD),
                 (KW - 1 - PAD, KW - 1 - PAD + OUT_PAD)),
        lhs_dilation=(STRIDE, STRIDE),
        rhs_dilation=(1, 1),
        dimension_numbers=("NCHW", "OIHW", "NCHW"),
        precision=jax.lax.Precision.HIGHEST,
    )
    mean = jnp.mean(y, axis=(0, 2, 3), keepdims=True)
    var = jnp.mean((y - mean) ** 2, axis=(0, 2, 3), keepdims=True)
    y = (y - mean) * jax.lax.rsqrt(var + EPS)
    y = y * gamma.reshape(1, Cout, 1, 1) + beta.reshape(1, Cout, 1, 1)
    return jnp.maximum(y, 0.0)


if __name__ == "__main__":
    # Small deterministic problem: N=2, Cin=4, Cout=4, H=W=16 -> output (2, 4, 32, 32).
    N, Cin, Cout, H, W = 2, 4, 4, 16, 16
    key = jax.random.PRNGKey(0)
    kx, kw, kg, kb = jax.random.split(key, 4)

    x = jax.random.normal(kx, (N, Cin, H, W), dtype=jnp.float32)
    # ConvTranspose2d weight shape: (in_channels, out_channels, KH, KW), bias=False
    weight = 0.1 * jax.random.normal(kw, (Cin, Cout, KH, KW), dtype=jnp.float32)
    # BatchNorm affine params. Training-mode forward uses batch statistics, so
    # momentum / running stats do not affect the output.
    gamma = 1.0 + 0.1 * jax.random.normal(kg, (Cout,), dtype=jnp.float32)
    beta = 0.1 * jax.random.normal(kb, (Cout,), dtype=jnp.float32)

    ref = jax.block_until_ready(reference_forward(x, weight, gamma, beta))

    # Exact f32 path. block_m=128 forces a 4-step grid so the tiled pipeline and
    # the cross-tile two-phase BatchNorm are actually exercised.
    out = jax.block_until_ready(
        decoder_block_forward(x, weight, gamma, beta,
                              block_m=128, compute_dtype=jnp.float32))
    assert out.shape == (N, Cout, STRIDE * H, STRIDE * W), out.shape
    np.testing.assert_allclose(np.asarray(out), np.asarray(ref), rtol=1e-2, atol=1e-2)

    # Default bf16 MXU-input fast path (f32 accumulation, f32 BN math) -- the
    # speed-first choice on v5e/v6e/v7x.
    out_bf16 = jax.block_until_ready(
        decoder_block_forward(x, weight, gamma, beta, block_m=128))
    np.testing.assert_allclose(np.asarray(out_bf16), np.asarray(ref),
                               rtol=5e-2, atol=5e-2)

    print("KERNEL_OK")
</pallas_src>

<mosaic_0001>
module attributes {stable_mosaic.version = 11 : i64} {
  func.func @_stats_kernel(%arg0: i32, %arg1: i32, %arg2: memref<128x16xf32, #tpu.memory_space<vmem>>, %arg3: memref<16x128xf32, #tpu.memory_space<vmem>>, %arg4: memref<8x128xf32, #tpu.memory_space<vmem>>) attributes {dimension_semantics = [#tpu.dimension_semantics<parallel>, #tpu.dimension_semantics<parallel>], iteration_bounds = array<i64: 4, 1>, scalar_prefetch = 0 : i64, scratch_operands = 0 : i64, tpu.core_type = #tpu.core_type<tc>, window_params = [{transform_indices = @transform_0, window_bounds = array<i64: 128, 16>}, {transform_indices = @transform_1, window_bounds = array<i64: 16, 128>}, {transform_indices = @transform_2, window_bounds = array<i64: 8, 128>}]} {
    %c0 = arith.constant 0 : index
    %c0_0 = arith.constant 0 : index
    %0 = vector.load %arg2[%c0, %c0_0] : memref<128x16xf32, #tpu.memory_space<vmem>>, vector<128x16xf32>
    %c0_1 = arith.constant 0 : index
    %c0_2 = arith.constant 0 : index
    %1 = vector.load %arg3[%c0_1, %c0_2] : memref<16x128xf32, #tpu.memory_space<vmem>>, vector<16x128xf32>
    %cst = arith.constant dense<0.000000e+00> : vector<128x128xf32>
    %2 = tpu.matmul %0, %1, %cst {dimension_numbers = #tpu.dot_dimension_numbers<[1], [0], [0], [1], [0, 0, 1, 1], [], []>} : vector<128x16xf32>, vector<16x128xf32>, vector<128x128xf32> -> vector<128x128xf32>
    %cst_3 = arith.constant dense<0.000000e+00> : vector<128xf32>
    %3 = vector.multi_reduction <add>, %2, %cst_3 [0] : vector<128x128xf32> to vector<128xf32>
    %4 = vector.shape_cast %3 : vector<128xf32> to vector<1x128xf32>
    %c0_4 = arith.constant 0 : index
    %c0_5 = arith.constant 0 : index
    %5 = vector.load %arg4[%c0_4, %c0_5] : memref<8x128xf32, #tpu.memory_space<vmem>>, vector<1x128xf32>
    tpu.vector_store %arg4[%c0_4, %c0_5], %4 {strides = array<i32>} : memref<8x128xf32, #tpu.memory_space<vmem>>, vector<1x128xf32>,
    %6 = arith.mulf %2, %2 : vector<128x128xf32>
    %cst_6 = arith.constant dense<0.000000e+00> : vector<128xf32>
    %7 = vector.multi_reduction <add>, %6, %cst_6 [0] : vector<128x128xf32> to vector<128xf32>
    %8 = vector.shape_cast %7 : vector<128xf32> to vector<1x128xf32>
    %c1 = arith.constant 1 : index
    %c0_7 = arith.constant 0 : index
    %9 = vector.load %arg4[%c1, %c0_7] : memref<8x128xf32, #tpu.memory_space<vmem>>, vector<1x128xf32>
    tpu.vector_store %arg4[%c1, %c0_7], %8 {strides = array<i32>} : memref<8x128xf32, #tpu.memory_space<vmem>>, vector<1x128xf32>,
    return
  }
  func.func @transform_0(%arg0: i32, %arg1: i32) -> (i32, i32) {
    %c0_i32 = arith.constant 0 : i32
    %c0_i32_0 = arith.constant 0 : i32
    return %arg0, %c0_i32 : i32, i32
  }
  func.func @transform_1(%arg0: i32, %arg1: i32) -> (i32, i32) {
    %c0_i32 = arith.constant 0 : i32
    %c0_i32_0 = arith.constant 0 : i32
    return %c0_i32, %arg1 : i32, i32
  }
  func.func @transform_2(%arg0: i32, %arg1: i32) -> (i32, i32) {
    %c0_i32 = arith.constant 0 : i32
    return %arg0, %arg1 : i32, i32
  }
}

</mosaic_0001>

<llo_original>
// kernel: tpu_custom_call.1
$region0: #{tpu_custom_call.1}
  #allocation0 [shape = 'u32[]', space=smem, size = 0x4, offset = 0x4, fixed_abs, tag = 'smem constant byte address 0x4 - core index']
  #allocation1 [shape = 'u32[144,128]{1,0:T(1,128)}', space=vmem, size = 0x12000, scoped, tag = 'internal scratch']
  %s0 = inlined_call_operand.hbm [shape: f32[512,16], index: 0, kind: input, shape index: {}]
  %s1 = inlined_call_operand.hbm [shape: f32[16,128], index: 1, kind: input, shape index: {}]
  %s2 = inlined_call_operand.hbm [shape: f32[32,128], index: 2, kind: output, shape index: {}]
  %s3 = sld [smem:[#allocation0]]
  $region49: #{tpu_custom_call.1} parent=0
    _
  %s5 = ssub.s32 1, %s3
  %s6 = scalar_select 0, %s5, %s3
  $region1: #{tpu_custom_call.1} parent=0
    #allocation2 [shape = 'u8[131072]{0}', space=vmem, size = 0x20000, scoped, tag = 'input window, operand 0']
    #allocation3 [shape = 's32[2]{0}', space=sflag, size = 0x8, scoped, tag = 'scoped memory for tpu_custom_call.1']
    #allocation4 [shape = 's32[2]{0}', space=sflag, size = 0x8, scoped, tag = 'scoped memory for tpu_custom_call.1']
    #allocation5 [shape = 'u8[8192]{0}', space=vmem, size = 0x2000, scoped, tag = 'input window, operand 1, single buffered']
    #allocation6 [shape = 's32[1]{0}', space=sflag, size = 0x4, scoped, tag = 'scoped memory for tpu_custom_call.1']
    #allocation7 [shape = 'u8[8192]{0}', space=vmem, size = 0x2000, scoped, tag = 'output window, operand 0']
    %7 = vsyncpa [#allocation3], 0
    %s8 = scalar_lea.sflag [#allocation3], 1
    %9 = vsyncpa %s8, 0
    %10 = vsyncpa [#allocation6], 0
    %11 = vsyncpa [#allocation4], 0
    %s12 = scalar_lea.sflag [#allocation4], 1
    %13 = vsyncpa %s12, 0
    loop: start=0, step=1, limit=6
    $region2: #{tpu_custom_call.1} parent=1 // loop_pre_header
      _
    $region3: #{tpu_custom_call.1} parent=1 // loop_header
      %s15 = sphi 0, %s19
      %p16 = scmp.ge.s32.totalorder %s15, 6
      %s22 = sphi 0, %s34
      %s23 = sphi 0, %s30
      %s24 = sphi 0, %s22
      %s25 = sphi 0, %s23
      %s26 = sphi 0, %s24
      %s27 = sphi 0, %s25
      %s37 = sphi 0, %s39
      %s40 = sphi 0, %s37
      %s41 = sphi 0, %s40
      %s57 = sphi 0, %s41
      %s63 = sphi 0, %s65
      %s66 = sphi 0, %s63
      %s67 = sphi 0, %s66
      %s83 = sphi 0, %s67
      %s91 = sphi 0, %s93
      %s94 = sphi 0, %s91
      %s95 = sphi 0, %s94
      %s111 = sphi 0, %s95
    $region4: #{tpu_custom_call.1} parent=1 // loop_header_branch
      %18 = sbr.rel (%p16) target = $region8
    $region5: #{tpu_custom_call.1} parent=1 // loop_body
      %s20 = ssub.s32 %s15, 1
      %s21 = ssub.s32 %s15, 2
      %s28 = sadd.s32 1, %s23
      %p29 = scmp.ge.s32.totalorder %s28, 1
      %s30 = scalar_select %p29, 0, %s28
      %s31 = sadd.s32 1, %s22
      %s32 = scalar_select %p29, %s31, %s22
      %p33 = scmp.ge.s32.totalorder %s32, 4
      %s34 = scalar_select %p33, 0, %s32
      %s35 = ssub.s32 %s22, %s34
      %p36 = scmp.eq.s32.totalorder %s35, 0
      %s38 = sadd.s32 %s37, 1
      %s39 = scalar_select %p36, %s37, %s38
      %p42 = pneg %p36
      %p43 = scmp.eq.s32.totalorder %s15, 3
      %p44 = por %p42, %p43
      %p45 = scmp.ne.s32.totalorder %s37, %s40
      %p46 = scmp.eq.s32.totalorder %s15, 0
      %p47 = por %p45, %p46
      %p48 = scmp.ne.s32.totalorder %s37, %s40
      %p49 = scmp.eq.s32.totalorder %s20, 3
      %p50 = por %p48, %p49
      %p51 = scmp.ne.s32.totalorder %s40, %s41
      %p52 = scmp.eq.s32.totalorder %s20, 0
      %p53 = por %p51, %p52
      %p54 = scmp.ne.s32.totalorder %s40, %s41
      %p55 = scmp.eq.s32.totalorder %s21, 3
      %p56 = por %p54, %p55
      %p58 = scmp.ne.s32.totalorder %s41, %s57
      %p59 = scmp.eq.s32.totalorder %s21, 0
      %p60 = por %p58, %p59
      %s61 = ssub.s32 %s23, %s30
      %p62 = scmp.eq.s32.totalorder %s61, 0
      %s64 = sadd.s32 %s63, 1
      %s65 = scalar_select %p62, %s63, %s64
      %p68 = pneg %p62
      %p69 = scmp.eq.s32.totalorder %s15, 3
      %p70 = por %p68, %p69
      %p71 = scmp.ne.s32.totalorder %s63, %s66
      %p72 = scmp.eq.s32.totalorder %s15, 0
      %p73 = por %p71, %p72
      %p74 = scmp.ne.s32.totalorder %s63, %s66
      %p75 = scmp.eq.s32.totalorder %s20, 3
      %p76 = por %p74, %p75
      %p77 = scmp.ne.s32.totalorder %s66, %s67
      %p78 = scmp.eq.s32.totalorder %s20, 0
      %p79 = por %p77, %p78
      %p80 = scmp.ne.s32.totalorder %s66, %s67
      %p81 = scmp.eq.s32.totalorder %s21, 3
      %p82 = por %p80, %p81
      %p84 = scmp.ne.s32.totalorder %s67, %s83
      %p85 = scmp.eq.s32.totalorder %s21, 0
      %p86 = por %p84, %p85
      %s87 = ssub.s32 %s22, %s34
      %s88 = ssub.s32 %s23, %s30
      %s89 = sor.u32 %s87, %s88
      %p90 = scmp.eq.s32.totalorder %s89, 0
      %s92 = sadd.s32 %s91, 1
      %s93 = scalar_select %p90, %s91, %s92
      %p96 = pneg %p90
      %p97 = scmp.eq.s32.totalorder %s15, 3
      %p98 = por %p96, %p97
      %p99 = scmp.ne.s32.totalorder %s91, %s94
      %p100 = scmp.eq.s32.totalorder %s15, 0
      %p101 = por %p99, %p100
      %p102 = scmp.ne.s32.totalorder %s91, %s94
      %p103 = scmp.eq.s32.totalorder %s20, 3
      %p104 = por %p102, %p103
      %p105 = scmp.ne.s32.totalorder %s94, %s95
      %p106 = scmp.eq.s32.totalorder %s20, 0
      %p107 = por %p105, %p106
      %p108 = scmp.ne.s32.totalorder %s94, %s95
      %p109 = scmp.eq.s32.totalorder %s21, 3
      %p110 = por %p108, %p109
      %p112 = scmp.ne.s32.totalorder %s95, %s111
      %p113 = scmp.eq.s32.totalorder %s21, 0
      %p114 = por %p112, %p113
      %p115 = scmp.le.s32.totalorder 1, %s15
      %p116 = scmp.lt.s32.totalorder %s15, 5
      %p117 = pnand %p115, %p116
      %p118 = pneg %p117
      // Predicated region
      $region9: #{tpu_custom_call.1} parent=5 // pred_check
        _
      $region10: #{tpu_custom_call.1} parent=5 // pred_check_branch
        %120 = sbr.rel (%p117) target = $region12
      $region11: #{tpu_custom_call.1} parent=5 // pred_region
        %s121 = ssub.s32 %s15, 1
        // Predicated region
        $region13: #{tpu_custom_call.1} parent=11 // pred_check
          %p122 = pneg %p79
        $region14: #{tpu_custom_call.1} parent=11 // pred_check_branch
          %124 = sbr.rel (%p122) target = $region16
        $region15: #{tpu_custom_call.1} parent=11 // pred_region
          %s126 = ssub.s32 256, 256
          %127 = vsyncadd [#allocation6], %s126
          %s128 = smul.addr %s25, 128
          %s129 = scalar_lea.hbm %s1, %s128
          %s130 = sshll.u32 [#allocation5], 4
          %s131 = int_to_ptr.vmem [resolvable:$true] %s130
          %136 = dma.hbm_to_vmem [thread:$0]  %s129, 256, %s131, [#allocation6], 128, 128, 8
        $region16: #{tpu_custom_call.1} parent=11 // pred_fallthru
          _
      $region12: #{tpu_custom_call.1} parent=5 // pred_fallthru
        _
      %p137 = scmp.lt.s32.totalorder %s15, 4
      // Predicated region
      $region17: #{tpu_custom_call.1} parent=5 // pred_check
        %p138 = pneg %p137
      $region18: #{tpu_custom_call.1} parent=5 // pred_check_branch
        %140 = sbr.rel (%p138) target = $region20
      $region19: #{tpu_custom_call.1} parent=5 // pred_region
        // Predicated region
        $region21: #{tpu_custom_call.1} parent=19 // pred_check
          %p141 = pneg %p47
        $region22: #{tpu_custom_call.1} parent=19 // pred_check_branch
          %143 = sbr.rel (%p141) target = $region24
        $region23: #{tpu_custom_call.1} parent=19 // pred_region
          %s144 = sand.u32 %s37, 1
          %s145 = scalar_lea.sflag [#allocation3], %s144
          %s146 = sand.u32 %s37, 1
          %s147 = smul.addr %s146, 128
          %s148 = scalar_lea.vmem [#allocation2], %s147
          %s149 = smul.u32 16, %s22
          %s151 = ssub.s32 2048, 2048
          %152 = vsyncadd %s145, %s151
          %s153 = smul.addr %s149, 128
          %s154 = scalar_lea.hbm %s0, %s153
          %s155 = sshll.u32 %s148, 4
          %s156 = int_to_ptr.vmem [resolvable:$true] %s155
          %161 = dma.hbm_to_vmem [thread:$0]  %s154, 2048, %s156, %s145, 128, 128, 8
        $region24: #{tpu_custom_call.1} parent=19 // pred_fallthru
          _
      $region20: #{tpu_custom_call.1} parent=5 // pred_fallthru
        _
      %p162 = scmp.le.s32.totalorder 1, %s15
      %p163 = scmp.lt.s32.totalorder %s15, 5
      %p164 = pnand %p162, %p163
      %p165 = pneg %p164
      // Predicated region
      $region25: #{tpu_custom_call.1} parent=5 // pred_check
        _
      $region26: #{tpu_custom_call.1} parent=5 // pred_check_branch
        %167 = sbr.rel (%p164) target = $region28
      $region27: #{tpu_custom_call.1} parent=5 // pred_region
        %s168 = ssub.s32 %s15, 1
        %s169 = sand.u32 %s40, 1
        %s170 = scalar_lea.sflag [#allocation3], %s169
        %s171 = sand.u32 %s40, 1
        %s172 = smul.addr %s171, 128
        %s173 = scalar_lea.vmem [#allocation2], %s172
        // Predicated region
        $region29: #{tpu_custom_call.1} parent=27 // pred_check
          %p174 = pneg %p53
        $region30: #{tpu_custom_call.1} parent=27 // pred_check_branch
          %176 = sbr.rel (%p174) target = $region32
        $region31: #{tpu_custom_call.1} parent=27 // pred_region
          %177 = dma.done %s170, 2048
        $region32: #{tpu_custom_call.1} parent=27 // pred_fallthru
          _
        // Predicated region
        $region33: #{tpu_custom_call.1} parent=27 // pred_check
          %p178 = pneg %p79
        $region34: #{tpu_custom_call.1} parent=27 // pred_check_branch
          %180 = sbr.rel (%p178) target = $region36
        $region35: #{tpu_custom_call.1} parent=27 // pred_region
          %181 = dma.done [#allocation6], 256
        $region36: #{tpu_custom_call.1} parent=27 // pred_fallthru
          _
        %s182 = sand.u32 %s40, 1
        %s183 = scalar_lea.sflag [#allocation3], %s182
        %s184 = sand.u32 %s40, 1
        %s185 = smul.addr %s184, 128
        %s186 = scalar_lea.vmem [#allocation2], %s185
        %p187 = pneg %p53
        %p188 = pneg %p50
        %p189 = pneg %p79
        %p190 = pneg %p76
        %p191 = pneg %p107
        %p192 = pneg %p104
        %s193 = sand.u32 %s94, 1
        %s194 = scalar_lea.sflag [#allocation4], %s193
        %s195 = sand.u32 %s94, 1
        %s196 = smul.addr %s195, 8
        %s197 = scalar_lea.vmem [#allocation7], %s196
        %s198 = smul.u32 16, %s24
        %v199 = vld [vmem:[%s173] sm:$0xff]
        %v200 = vld [vmem:[%s173 + $0x8] sm:$0xff]
        %v201 = vld [vmem:[%s173 + $0x10] sm:$0xff]
        %v202 = vld [vmem:[%s173 + $0x18] sm:$0xff]
        %v203 = vld [vmem:[%s173 + $0x20] sm:$0xff]
        %v204 = vld [vmem:[%s173 + $0x28] sm:$0xff]
        %v205 = vld [vmem:[%s173 + $0x30] sm:$0xff]
        %v206 = vld [vmem:[%s173 + $0x38] sm:$0xff]
        %v207 = vld [vmem:[%s173 + $0x40] sm:$0xff]
        %v208 = vld [vmem:[%s173 + $0x48] sm:$0xff]
        %v209 = vld [vmem:[%s173 + $0x50] sm:$0xff]
        %v210 = vld [vmem:[%s173 + $0x58] sm:$0xff]
        %v211 = vld [vmem:[%s173 + $0x60] sm:$0xff]
        %v212 = vld [vmem:[%s173 + $0x68] sm:$0xff]
        %v213 = vld [vmem:[%s173 + $0x70] sm:$0xff]
        %v214 = vld [vmem:[%s173 + $0x78] sm:$0xff]
        %v215 = vld [vmem:[#allocation5] sm:$0xff]
        %v216 = vld [vmem:[#allocation5 + $0x8] sm:$0xff]
        %vm217 = vcmask 130048
        %v219 = vsel %vm217, %v199, 0
        %v222 = vsel %vm217, %v200, 0
        %v225 = vsel %vm217, %v201, 0
        %v228 = vsel %vm217, %v202, 0
        %v231 = vsel %vm217, %v203, 0
        %v234 = vsel %vm217, %v204, 0
        %v237 = vsel %vm217, %v205, 0
        %v240 = vsel %vm217, %v206, 0
        %v243 = vsel %vm217, %v207, 0
        %v246 = vsel %vm217, %v208, 0
        %v249 = vsel %vm217, %v209, 0
        %v252 = vsel %vm217, %v210, 0
        %v255 = vsel %vm217, %v211, 0
        %v258 = vsel %vm217, %v212, 0
        %v261 = vsel %vm217, %v213, 0
        %v264 = vsel %vm217, %v214, 0
        %266 = vmatprep.subr.mxu0 0.0
        %267 = vmatpush1.msra.mxu0 %v215
        %268 = vmatprep.subr.mxu0 0.0
        %269 = vmatpush1.msra.mxu0 %v216
        %270 = vmatprep.subr.mxu0 0.0
        %271 = vmatpush1.msra.mxu0 0.0
        %272 = vmatprep.subr.mxu0 0.0
        %273 = vmatpush1.msra.mxu0 0.0
        %274 = vmatprep.subr.mxu0 0.0
        %275 = vmatpush1.msra.mxu0 0.0
        %276 = vmatprep.subr.mxu0 0.0
        %277 = vmatpush1.msra.mxu0 0.0
        %278 = vmatprep.subr.mxu0 0.0
        %279 = vmatpush1.msra.mxu0 0.0
        %280 = vmatprep.subr.mxu0 0.0
        %281 = vmatpush1.msra.mxu0 0.0
        %282 = vmatprep.subr.mxu0 0.0
        %283 = vmatpush1.msra.mxu0 0.0
        %284 = vmatprep.subr.mxu0 0.0
        %285 = vmatpush1.msra.mxu0 0.0
        %286 = vmatprep.subr.mxu0 0.0
        %287 = vmatpush1.msra.mxu0 0.0
        %288 = vmatprep.subr.mxu0 0.0
        %289 = vmatpush1.msra.mxu0 0.0
        %290 = vmatprep.subr.mxu0 0.0
        %291 = vmatpush1.msra.mxu0 0.0
        %292 = vmatprep.subr.mxu0 0.0
        %293 = vmatpush1.msra.mxu0 0.0
        %294 = vmatprep.subr.mxu0 0.0
        %295 = vmatpush1.msra.mxu0 0.0
        %296 = vmatprep.subr.mxu0 0.0
        %297 = vmatpush1.msra.mxu0 0.0
        %298 = vmatprep.subr.mxu0 0.0
        %299 = vmatpush1.msra.mxu0 0.0
        %300 = vmatprep.subr.mxu0 0.0
        %301 = vmatpush1.msra.mxu0 0.0
        %302 = vmatprep.subr.mxu0 0.0
        %303 = vmatpush1.msra.mxu0 0.0
        %304 = vmatprep.subr.mxu0 0.0
        %305 = vmatpush1.msra.mxu0 0.0
        %306 = vmatprep.subr.mxu0 0.0
        %307 = vmatpush1.msra.mxu0 0.0
        %308 = vmatprep.subr.mxu0 0.0
        %309 = vmatpush1.msra.mxu0 0.0
        %310 = vmatprep.subr.mxu0 0.0
        %311 = vmatpush1.msra.mxu0 0.0
        %312 = vmatprep.subr.mxu0 0.0
        %313 = vmatpush1.msra.mxu0 0.0
        %314 = vmatprep.subr.mxu0 0.0
        %315 = vmatpush1.msra.mxu0 0.0
        %316 = vmatprep.subr.mxu0 0.0
        %317 = vmatpush1.msra.mxu0 0.0
        %318 = vmatprep.subr.mxu0 0.0
        %319 = vmatpush1.msra.mxu0 0.0
        %320 = vmatprep.subr.mxu0 0.0
        %321 = vmatpush1.msra.mxu0 0.0
        %322 = vmatprep.subr.mxu0 0.0
        %323 = vmatpush1.msra.mxu0 0.0
        %324 = vmatprep.subr.mxu0 0.0
        %325 = vmatpush1.msra.mxu0 0.0
        %326 = vmatprep.subr.mxu0 0.0
        %327 = vmatpush1.msra.mxu0 0.0
        %328 = vmatprep.subr.mxu0 0.0
        %329 = vmatpush1.msra.mxu0 0.0
        %330 = vmatprep.mubr.f32.mxu0 0.0
        %331 = vmatmul.mubr.f32.gmra.mrb[0].mxu0 %v219
        %v332 = vpop.f32.mrb[0].mxu0
        %v333 = vadd.f32 0.0, %v332
        %v334 = vpop.f32.mrb[0].mxu0
        %335 = vmatprep.mubr.f32.mxu0 0.0
        %336 = vmatmul.mubr.f32.gmra.mrb[0].mxu0 %v222
        %v337 = vpop.f32.mrb[0].mxu0
        %v338 = vadd.f32 0.0, %v337
        %v339 = vpop.f32.mrb[0].mxu0
        %340 = vmatprep.mubr.f32.mxu0 0.0
        %341 = vmatmul.mubr.f32.gmra.mrb[0].mxu0 %v225
        %v342 = vpop.f32.mrb[0].mxu0
        %v343 = vadd.f32 0.0, %v342
        %v344 = vpop.f32.mrb[0].mxu0
        %345 = vmatprep.mubr.f32.mxu0 0.0
        %346 = vmatmul.mubr.f32.gmra.mrb[0].mxu0 %v228
        %v347 = vpop.f32.mrb[0].mxu0
        %v348 = vadd.f32 0.0, %v347
        %v349 = vpop.f32.mrb[0].mxu0
        %350 = vmatprep.mubr.f32.mxu0 0.0
        %351 = vmatmul.mubr.f32.gmra.mrb[0].mxu0 %v231
        %v352 = vpop.f32.mrb[0].mxu0
        %v353 = vadd.f32 0.0, %v352
        %v354 = vpop.f32.mrb[0].mxu0
        %355 = vmatprep.mubr.f32.mxu0 0.0
        %356 = vmatmul.mubr.f32.gmra.mrb[0].mxu0 %v234
        %v357 = vpop.f32.mrb[0].mxu0
        %v358 = vadd.f32 0.0, %v357
        %v359 = vpop.f32.mrb[0].mxu0
        %360 = vmatprep.mubr.f32.mxu0 0.0
        %361 = vmatmul.mubr.f32.gmra.mrb[0].mxu0 %v237
        %v362 = vpop.f32.mrb[0].mxu0
        %v363 = vadd.f32 0.0, %v362
        %v364 = vpop.f32.mrb[0].mxu0
        %365 = vmatprep.mubr.f32.mxu0 0.0
        %366 = vmatmul.mubr.f32.gmra.mrb[0].mxu0 %v240
        %v367 = vpop.f32.mrb[0].mxu0
        %v368 = vadd.f32 0.0, %v367
        %v369 = vpop.f32.mrb[0].mxu0
        %370 = vmatprep.mubr.f32.mxu0 0.0
        %371 = vmatmul.mubr.f32.gmra.mrb[0].mxu0 %v243
        %v372 = vpop.f32.mrb[0].mxu0
        %v373 = vadd.f32 0.0, %v372
        %v374 = vpop.f32.mrb[0].mxu0
        %375 = vmatprep.mubr.f32.mxu0 0.0
        %376 = vmatmul.mubr.f32.gmra.mrb[0].mxu0 %v246
        %v377 = vpop.f32.mrb[0].mxu0
        %v378 = vadd.f32 0.0, %v377
        %v379 = vpop.f32.mrb[0].mxu0
        %380 = vmatprep.mubr.f32.mxu0 0.0
        %381 = vmatmul.mubr.f32.gmra.mrb[0].mxu0 %v249
        %v382 = vpop.f32.mrb[0].mxu0
        %v383 = vadd.f32 0.0, %v382
        %v384 = vpop.f32.mrb[0].mxu0
        %385 = vmatprep.mubr.f32.mxu0 0.0
        %386 = vmatmul.mubr.f32.gmra.mrb[0].mxu0 %v252
        %v387 = vpop.f32.mrb[0].mxu0
        %v388 = vadd.f32 0.0, %v387
        %v389 = vpop.f32.mrb[0].mxu0
        %390 = vmatprep.mubr.f32.mxu0 0.0
        %391 = vmatmul.mubr.f32.gmra.mrb[0].mxu0 %v255
        %v392 = vpop.f32.mrb[0].mxu0
        %v393 = vadd.f32 0.0, %v392
        %v394 = vpop.f32.mrb[0].mxu0
        %395 = vmatprep.mubr.f32.mxu0 0.0
        %396 = vmatmul.mubr.f32.gmra.mrb[0].mxu0 %v258
        %v397 = vpop.f32.mrb[0].mxu0
        %v398 = vadd.f32 0.0, %v397
        %v399 = vpop.f32.mrb[0].mxu0
        %400 = vmatprep.mubr.f32.mxu0 0.0
        %401 = vmatmul.mubr.f32.gmra.mrb[0].mxu0 %v261
        %v402 = vpop.f32.mrb[0].mxu0
        %v403 = vadd.f32 0.0, %v402
        %v404 = vpop.f32.mrb[0].mxu0
        %405 = vmatprep.mubr.f32.mxu0 0.0
        %406 = vmatmul.mubr.f32.gmra.mrb[0].mxu0 %v264
        %v407 = vpop.f32.mrb[0].mxu0
        %v408 = vadd.f32 0.0, %v407
        %v409 = vpop.f32.mrb[0].mxu0
        %410 = vdwg.mxu0
        %v411 = vadd.f32 %v333, %v338
        %v412 = vadd.f32 %v411, %v343
        %v413 = vadd.f32 %v412, %v348
        %v414 = vadd.f32 %v413, %v353
        %v415 = vadd.f32 %v414, %v358
        %v416 = vadd.f32 %v415, %v363
        %v417 = vadd.f32 %v416, %v368
        %v418 = vadd.f32 %v417, %v373
        %v419 = vadd.f32 %v418, %v378
        %v420 = vadd.f32 %v419, %v383
        %v421 = vadd.f32 %v420, %v388
        %v422 = vadd.f32 %v421, %v393
        %v423 = vadd.f32 %v422, %v398
        %v424 = vadd.f32 %v423, %v403
        %v425 = vadd.f32 %v424, %v408
        %v426 = vrot.slane %v425, 4
        %v427 = vadd.f32 %v425, %v426
        %v428 = vrot.slane %v427, 2
        %v429 = vadd.f32 %v427, %v428
        %v430 = vrot.slane %v429, 1
        %v431 = vadd.f32 %v429, %v430
        %432 = vst [vmem:[%s197] sm:$0x1] %v431
        %v433 = vmul.f32 %v333, %v333
        %v434 = vmul.f32 %v338, %v338
        %v435 = vmul.f32 %v343, %v343
        %v436 = vmul.f32 %v348, %v348
        %v437 = vmul.f32 %v353, %v353
        %v438 = vmul.f32 %v358, %v358
        %v439 = vmul.f32 %v363, %v363
        %v440 = vmul.f32 %v368, %v368
        %v441 = vmul.f32 %v373, %v373
        %v442 = vmul.f32 %v378, %v378
        %v443 = vmul.f32 %v383, %v383
        %v444 = vmul.f32 %v388, %v388
        %v445 = vmul.f32 %v393, %v393
        %v446 = vmul.f32 %v398, %v398
        %v447 = vmul.f32 %v403, %v403
        %v448 = vmul.f32 %v408, %v408
        %v449 = vadd.f32 %v433, %v434
        %v450 = vadd.f32 %v449, %v435
        %v451 = vadd.f32 %v450, %v436
        %v452 = vadd.f32 %v451, %v437
        %v453 = vadd.f32 %v452, %v438
        %v454 = vadd.f32 %v453, %v439
        %v455 = vadd.f32 %v454, %v440
        %v456 = vadd.f32 %v455, %v441
        %v457 = vadd.f32 %v456, %v442
        %v458 = vadd.f32 %v457, %v443
        %v459 = vadd.f32 %v458, %v444
        %v460 = vadd.f32 %v459, %v445
        %v461 = vadd.f32 %v460, %v446
        %v462 = vadd.f32 %v461, %v447
        %v463 = vadd.f32 %v462, %v448
        %v464 = vrot.slane %v463, 4
        %v465 = vadd.f32 %v463, %v464
        %v466 = vrot.slane %v465, 2
        %v467 = vadd.f32 %v465, %v466
        %v468 = vrot.slane %v467, 1
        %v469 = vadd.f32 %v467, %v468
        %470 = vst [vmem:[%s197 + $0x1] sm:$0x1] %v469
        %s471 = sand.u32 %s94, 1
        %s472 = scalar_lea.sflag [#allocation4], %s471
        %s473 = sand.u32 %s94, 1
        %s474 = smul.addr %s473, 8
        %s475 = scalar_lea.vmem [#allocation7], %s474
        // Predicated region
        $region37: #{tpu_custom_call.1} parent=27 // pred_check
          %p476 = pneg %p104
        $region38: #{tpu_custom_call.1} parent=27 // pred_check_branch
          %478 = sbr.rel (%p476) target = $region40
        $region39: #{tpu_custom_call.1} parent=27 // pred_region
          %s480 = ssub.s32 128, 128
          %481 = vsyncadd %s472, %s480
          %s482 = sadd.s32 %s25, %s24
          %s483 = smul.addr %s482, 128
          %s484 = scalar_lea.hbm %s2, %s483
          %s486 = sshll.u32 %s475, 4
          %s487 = int_to_ptr.vmem [resolvable:$true] %s486
          %489 = dma.vmem_to_hbm [thread:$0]  %s487, 128, %s484, %s472
        $region40: #{tpu_custom_call.1} parent=27 // pred_fallthru
          _
      $region28: #{tpu_custom_call.1} parent=5 // pred_fallthru
        _
      %p490 = scmp.le.s32.totalorder 2, %s15
      // Predicated region
      $region41: #{tpu_custom_call.1} parent=5 // pred_check
        %p491 = pneg %p490
      $region42: #{tpu_custom_call.1} parent=5 // pred_check_branch
        %493 = sbr.rel (%p491) target = $region44
      $region43: #{tpu_custom_call.1} parent=5 // pred_region
        %s494 = ssub.s32 %s15, 2
        // Predicated region
        $region45: #{tpu_custom_call.1} parent=43 // pred_check
          %p495 = pneg %p110
        $region46: #{tpu_custom_call.1} parent=43 // pred_check_branch
          %497 = sbr.rel (%p495) target = $region48
        $region47: #{tpu_custom_call.1} parent=43 // pred_region
          %s498 = sand.u32 %s95, 1
          %s499 = scalar_lea.sflag [#allocation4], %s498
          %s500 = sand.u32 %s95, 1
          %s501 = smul.addr %s500, 8
          %s502 = scalar_lea.vmem [#allocation7], %s501
          %503 = dma.done %s499, 128
        $region48: #{tpu_custom_call.1} parent=43 // pred_fallthru
          _
      $region44: #{tpu_custom_call.1} parent=5 // pred_fallthru
        _
    $region6: #{tpu_custom_call.1} parent=1 // loop_footer
      %s19 = sadd.s32 1, %s15
    $region7: #{tpu_custom_call.1} parent=1 // loop_footer_branch
      %14 = sbr.rel target = $region3
    $region8: #{tpu_custom_call.1} parent=1 // loop_exit
      _
    %504 = vsyncpa [#allocation3], 1
    %s505 = scalar_lea.sflag [#allocation3], 1
    %506 = vsyncpa %s505, 1
    %507 = vsyncpa [#allocation6], 1
    %508 = vsyncpa [#allocation4], 1
    %s509 = scalar_lea.sflag [#allocation4], 1
    %510 = vsyncpa %s509, 1

</llo_original>
